<compile_context>
chip_gen: v6e
topology: v6e:2x2x1
jax: 0.10.0
libtpu: 0.0.40
codegen_flags: <defaults>
</compile_context>

<pallas_src>
import functools

import jax
import jax.numpy as jnp
from jax.experimental import pallas as pl
from jax.experimental.pallas import tpu as pltpu

_LANE = 128


def _round_up(x, m):
    return ((x + m - 1) // m) * m


def _dirlight_kernel(light_ref, normals_ref, out_ref, *,
                     dx, dy, dz, scx, scy, scz):
    # Block shape (3, TS, 128): channel axis leading, faces dense over
    # (sublane=TS, lane=128).  All loads/stores are full-vreg and unmasked.
    l = light_ref[...]
    n = normals_ref[...]
    if l.dtype != jnp.float32:
        l = l.astype(jnp.float32)
    if n.dtype != jnp.float32:
        n = n.astype(jnp.float32)

    # relu(n . d) over the tiny channel axis -> (TS, 128).  Pure VPU work.
    cos = jnp.maximum(n[0] * dx + n[1] * dy + n[2] * dz, 0.0)

    out_dtype = out_ref.dtype
    # Three dense (TS, 128) channel-slab stores; intensity is pre-folded into
    # (scx, scy, scz) as Python floats.
    out_ref[0] = (l[0] + scx * cos).astype(out_dtype)
    out_ref[1] = (l[1] + scy * cos).astype(out_dtype)
    out_ref[2] = (l[2] + scz * cos).astype(out_dtype)


def directional_lighting_channel_minor(light_t, normals_t, light_intensity=0.5,
                                       light_color=(1.0, 1.0, 1.0),
                                       light_direction=(0.0, 1.0, 0.0),
                                       tile_rows=1024,
                                       donate_light=False):
    """Core kernel. light_t, normals_t: [B, 3, NF] (channel-minor). Returns [B, 3, NF]."""
    B, C, NF = light_t.shape
    assert C == 3 and normals_t.shape == light_t.shape

    dtype = light_t.dtype
    itemsize = jnp.dtype(dtype).itemsize
    # Sublane granularity for dense tiles: 8 (f32), 16 (bf16), 32 (int8/fp8).
    sub = max(8, 32 // max(int(itemsize), 1))

    # Pad faces only to a lane multiple (128), NOT to the full tile.
    nf_pad = _round_up(max(NF, 1), _LANE)
    if nf_pad != NF:
        pad = ((0, 0), (0, 0), (0, nf_pad - NF))
        light_t = jnp.pad(light_t, pad)      # zero normals -> cos == 0 in padding
        normals_t = jnp.pad(normals_t, pad)
    ns = nf_pad // _LANE

    # Free, contiguous reshape to the sublane-dense 4D layout.
    light4 = light_t.reshape(B, 3, ns, _LANE)
    normals4 = normals_t.reshape(B, 3, ns, _LANE)

    # Tile along the NS axis.
    ts = min(int(tile_rows), ns)
    if ts < ns:
        ts = max(sub, (ts // sub) * sub)
    # v7x has 2 TensorCores: when B == 1, guarantee >= 2 grid steps along the
    # NS 'parallel' axis so both cores get work (v5e/v6e are single-TC).
    if B == 1 and ns >= 2 * sub:
        half = _round_up(-(-ns // 2), sub)
        if half < ns:
            ts = min(ts, half)
    grid_ns = pl.cdiv(ns, ts)

    intensity = float(light_intensity)
    cx, cy, cz = (float(c) for c in light_color)
    dx, dy, dz = (float(d) for d in light_direction)

    kernel = functools.partial(
        _dirlight_kernel,
        dx=dx, dy=dy, dz=dz,
        scx=intensity * cx, scy=intensity * cy, scz=intensity * cz,
    )

    # Leading batch dim squeezed out of the kernel refs; kernel sees (3, TS, 128).
    block = pl.BlockSpec((None, 3, ts, _LANE), lambda b, j: (b, 0, j, 0))

    out4 = pl.pallas_call(
        kernel,
        out_shape=jax.ShapeDtypeStruct((B, 3, ns, _LANE), dtype),
        grid_spec=pl.GridSpec(
            grid=(B, grid_ns),
            in_specs=[block, block],
            out_specs=block,
        ),
        compiler_params=pltpu.CompilerParams(
            # Both axes are independent -> shardable across v7x's 2 TensorCores.
            dimension_semantics=("parallel", "parallel")),
        cost_estimate=pl.CostEstimate(
            flops=12 * B * nf_pad,
            transcendentals=0,
            bytes_accessed=3 * B * 3 * nf_pad * int(itemsize)),
        # Optional: alias the light input to the output when the caller donates
        # it (avoids an extra output allocation at the XLA boundary).
        input_output_aliases=({0: 0} if donate_light else {}),
    )(light4, normals4)

    out_t = out4.reshape(B, 3, nf_pad)
    if nf_pad != NF:
        out_t = out_t[:, :, :NF]
    return out_t


def directional_lighting(light, normals, light_intensity=0.5,
                         light_color=(1.0, 1.0, 1.0),
                         light_direction=(0.0, 1.0, 0.0),
                         tile_rows=1024):
    """PyTorch-compatible layout. light, normals: [B, NF, 3]. Returns [B, NF, 3].

    NOTE: this wrapper pays boundary transposes to/from channel-minor layout
    (each is a full HBM read+write).  In a full rendering pipeline keep the
    lighting stage in [B, 3, NF] and call `directional_lighting_channel_minor`
    directly, transposing once at the pipeline boundary rather than per call.
    """
    B, NF, C = light.shape
    assert C == 3 and normals.shape == light.shape

    light_t = jnp.transpose(light, (0, 2, 1))      # [B, 3, NF]
    normals_t = jnp.transpose(normals, (0, 2, 1))  # [B, 3, NF]

    out_t = directional_lighting_channel_minor(
        light_t, normals_t, light_intensity, light_color, light_direction,
        tile_rows=tile_rows)

    return jnp.transpose(out_t, (0, 2, 1))         # back to [B, NF, 3]


class DirectionalLighting:
    """JAX/Pallas port of metaras.lighting.DirectionalLighting."""

    def __init__(self, light_intensity=0.5, light_color=(1, 1, 1),
                 light_direction=(0, 1, 0)):
        self.light_intensity = light_intensity
        self.light_color = light_color
        self.light_direction = light_direction

    def __call__(self, light, normals):
        return directional_lighting(light, normals, self.light_intensity,
                                    self.light_color, self.light_direction)


def _reference(light, normals, intensity, color, direction):
    direction = jnp.asarray(direction, jnp.float32)
    color = jnp.asarray(color, jnp.float32)
    cosine = jnp.maximum(jnp.sum(normals * direction[None, None, :], axis=2), 0.0)
    return light + intensity * color[None, None, :] * cosine[:, :, None]


if __name__ == "__main__":
    key = jax.random.PRNGKey(0)
    k1, k2 = jax.random.split(key)

    B, NF = 2, 256  # batch of 2, 256 faces, 3 channels
    light = jax.random.uniform(k1, (B, NF, 3), dtype=jnp.float32)
    normals = jax.random.normal(k2, (B, NF, 3), dtype=jnp.float32)
    normals = normals / jnp.linalg.norm(normals, axis=-1, keepdims=True)

    module = DirectionalLighting(light_intensity=0.5,
                                 light_color=(1.0, 1.0, 1.0),
                                 light_direction=(0.0, 1.0, 0.0))

    out = module(light, normals)
    jax.block_until_ready(out)

    ref = _reference(light, normals, 0.5, (1.0, 1.0, 1.0), (0.0, 1.0, 0.0))
    assert out.shape == (B, NF, 3)
    assert jnp.allclose(out, ref, atol=1e-5, rtol=1e-5), "mismatch vs reference"

    # Non-lane-aligned face count (exercises the minimal 128-pad + slice path).
    NF2 = 200
    l2 = jax.random.uniform(k1, (B, NF2, 3), dtype=jnp.float32)
    n2 = jax.random.normal(k2, (B, NF2, 3), dtype=jnp.float32)
    n2 = n2 / jnp.linalg.norm(n2, axis=-1, keepdims=True)
    out2 = module(l2, n2)
    jax.block_until_ready(out2)
    ref2 = _reference(l2, n2, 0.5, (1.0, 1.0, 1.0), (0.0, 1.0, 0.0))
    assert jnp.allclose(out2, ref2, atol=1e-5, rtol=1e-5), "mismatch (padded path)"

    # Channel-minor core path (no wrapper transposes), B == 1 to exercise the
    # two-grid-step split and the partial final block via pl.cdiv.
    NF3 = 5 * 1024  # ns = 40 rows, ts capped to 24 -> 2 grid steps, last partial
    l3 = jax.random.uniform(k1, (1, 3, NF3), dtype=jnp.float32)
    n3 = jax.random.normal(k2, (1, 3, NF3), dtype=jnp.float32)
    out3 = directional_lighting_channel_minor(l3, n3, 0.5, (1.0, 1.0, 1.0),
                                              (0.0, 1.0, 0.0), tile_rows=24)
    jax.block_until_ready(out3)
    ref3 = jnp.transpose(
        _reference(jnp.transpose(l3, (0, 2, 1)), jnp.transpose(n3, (0, 2, 1)),
                   0.5, (1.0, 1.0, 1.0), (0.0, 1.0, 0.0)), (0, 2, 1))
    assert jnp.allclose(out3, ref3, atol=1e-5, rtol=1e-5), "mismatch (channel-minor path)"

    print("KERNEL_OK")
</pallas_src>

<mosaic_0001>
module attributes {stable_mosaic.version = 11 : i64} {
  func.func @_dirlight_kernel(%arg0: i32, %arg1: i32, %arg2: memref<1x3x2x128xf32, #tpu.memory_space<vmem>>, %arg3: memref<1x3x2x128xf32, #tpu.memory_space<vmem>>, %arg4: memref<1x3x2x128xf32, #tpu.memory_space<vmem>>) attributes {dimension_semantics = [#tpu.dimension_semantics<parallel>, #tpu.dimension_semantics<parallel>], iteration_bounds = array<i64: 2, 1>, scalar_prefetch = 0 : i64, scratch_operands = 0 : i64, tpu.core_type = #tpu.core_type<tc>, window_params = [{transform_indices = @transform_0, window_bounds = array<i64: 1, 3, 2, 128>}, {transform_indices = @transform_1, window_bounds = array<i64: 1, 3, 2, 128>}, {transform_indices = @transform_2, window_bounds = array<i64: 1, 3, 2, 128>}]} {
    %c0 = arith.constant 0 : index
    %c0_0 = arith.constant 0 : index
    %c0_1 = arith.constant 0 : index
    %c0_2 = arith.constant 0 : index
    %0 = vector.load %arg2[%c0, %c0_0, %c0_1, %c0_2] : memref<1x3x2x128xf32, #tpu.memory_space<vmem>>, vector<1x3x2x128xf32>
    %1 = vector.shape_cast %0 : vector<1x3x2x128xf32> to vector<3x2x128xf32>
    %c0_3 = arith.constant 0 : index
    %c0_4 = arith.constant 0 : index
    %c0_5 = arith.constant 0 : index
    %c0_6 = arith.constant 0 : index
    %2 = vector.load %arg3[%c0_3, %c0_4, %c0_5, %c0_6] : memref<1x3x2x128xf32, #tpu.memory_space<vmem>>, vector<1x3x2x128xf32>
    %3 = vector.shape_cast %2 : vector<1x3x2x128xf32> to vector<3x2x128xf32>
    %4 = vector.extract_strided_slice %3 {offsets = [0, 0, 0], sizes = [1, 2, 128], strides = [1, 1, 1]} : vector<3x2x128xf32> to vector<1x2x128xf32>
    %5 = vector.shape_cast %4 : vector<1x2x128xf32> to vector<2x128xf32>
    %cst = arith.constant 0.000000e+00 : f32
    %6 = vector.broadcast %cst : f32 to vector<2x128xf32>
    %7 = arith.mulf %5, %6 : vector<2x128xf32>
    %8 = vector.extract_strided_slice %3 {offsets = [1, 0, 0], sizes = [1, 2, 128], strides = [1, 1, 1]} : vector<3x2x128xf32> to vector<1x2x128xf32>
    %9 = vector.shape_cast %8 : vector<1x2x128xf32> to vector<2x128xf32>
    %cst_7 = arith.constant 1.000000e+00 : f32
    %10 = vector.broadcast %cst_7 : f32 to vector<2x128xf32>
    %11 = arith.mulf %9, %10 : vector<2x128xf32>
    %12 = arith.addf %7, %11 : vector<2x128xf32>
    %13 = vector.extract_strided_slice %3 {offsets = [2, 0, 0], sizes = [1, 2, 128], strides = [1, 1, 1]} : vector<3x2x128xf32> to vector<1x2x128xf32>
    %14 = vector.shape_cast %13 : vector<1x2x128xf32> to vector<2x128xf32>
    %cst_8 = arith.constant 0.000000e+00 : f32
    %15 = vector.broadcast %cst_8 : f32 to vector<2x128xf32>
    %16 = arith.mulf %14, %15 : vector<2x128xf32>
    %17 = arith.addf %12, %16 : vector<2x128xf32>
    %cst_9 = arith.constant 0.000000e+00 : f32
    %18 = vector.broadcast %cst_9 : f32 to vector<2x128xf32>
    %19 = arith.maximumf %17, %18 : vector<2x128xf32>
    %20 = vector.extract_strided_slice %1 {offsets = [0, 0, 0], sizes = [1, 2, 128], strides = [1, 1, 1]} : vector<3x2x128xf32> to vector<1x2x128xf32>
    %21 = vector.shape_cast %20 : vector<1x2x128xf32> to vector<2x128xf32>
    %cst_10 = arith.constant 5.000000e-01 : f32
    %22 = vector.broadcast %cst_10 : f32 to vector<2x128xf32>
    %23 = arith.mulf %22, %19 : vector<2x128xf32>
    %24 = arith.addf %21, %23 : vector<2x128xf32>
    %c0_11 = arith.constant 0 : index
    %c0_12 = arith.constant 0 : index
    %c0_13 = arith.constant 0 : index
    %c0_14 = arith.constant 0 : index
    %25 = vector.load %arg4[%c0_11, %c0_12, %c0_13, %c0_14] : memref<1x3x2x128xf32, #tpu.memory_space<vmem>>, vector<1x1x2x128xf32>
    %26 = vector.shape_cast %25 : vector<1x1x2x128xf32> to vector<2x128xf32>
    %27 = vector.shape_cast %24 : vector<2x128xf32> to vector<1x1x2x128xf32>
    tpu.vector_store %arg4[%c0_11, %c0_12, %c0_13, %c0_14], %27 {strides = array<i32>} : memref<1x3x2x128xf32, #tpu.memory_space<vmem>>, vector<1x1x2x128xf32>,
    %28 = vector.extract_strided_slice %1 {offsets = [1, 0, 0], sizes = [1, 2, 128], strides = [1, 1, 1]} : vector<3x2x128xf32> to vector<1x2x128xf32>
    %29 = vector.shape_cast %28 : vector<1x2x128xf32> to vector<2x128xf32>
    %cst_15 = arith.constant 5.000000e-01 : f32
    %30 = vector.broadcast %cst_15 : f32 to vector<2x128xf32>
    %31 = arith.mulf %30, %19 : vector<2x128xf32>
    %32 = arith.addf %29, %31 : vector<2x128xf32>
    %c0_16 = arith.constant 0 : index
    %c1 = arith.constant 1 : index
    %c0_17 = arith.constant 0 : index
    %c0_18 = arith.constant 0 : index
    %33 = vector.load %arg4[%c0_16, %c1, %c0_17, %c0_18] : memref<1x3x2x128xf32, #tpu.memory_space<vmem>>, vector<1x1x2x128xf32>
    %34 = vector.shape_cast %33 : vector<1x1x2x128xf32> to vector<2x128xf32>
    %35 = vector.shape_cast %32 : vector<2x128xf32> to vector<1x1x2x128xf32>
    tpu.vector_store %arg4[%c0_16, %c1, %c0_17, %c0_18], %35 {strides = array<i32>} : memref<1x3x2x128xf32, #tpu.memory_space<vmem>>, vector<1x1x2x128xf32>,
    %36 = vector.extract_strided_slice %1 {offsets = [2, 0, 0], sizes = [1, 2, 128], strides = [1, 1, 1]} : vector<3x2x128xf32> to vector<1x2x128xf32>
    %37 = vector.shape_cast %36 : vector<1x2x128xf32> to vector<2x128xf32>
    %cst_19 = arith.constant 5.000000e-01 : f32
    %38 = vector.broadcast %cst_19 : f32 to vector<2x128xf32>
    %39 = arith.mulf %38, %19 : vector<2x128xf32>
    %40 = arith.addf %37, %39 : vector<2x128xf32>
    %c0_20 = arith.constant 0 : index
    %c2 = arith.constant 2 : index
    %c0_21 = arith.constant 0 : index
    %c0_22 = arith.constant 0 : index
    %41 = vector.load %arg4[%c0_20, %c2, %c0_21, %c0_22] : memref<1x3x2x128xf32, #tpu.memory_space<vmem>>, vector<1x1x2x128xf32>
    %42 = vector.shape_cast %41 : vector<1x1x2x128xf32> to vector<2x128xf32>
    %43 = vector.shape_cast %40 : vector<2x128xf32> to vector<1x1x2x128xf32>
    tpu.vector_store %arg4[%c0_20, %c2, %c0_21, %c0_22], %43 {strides = array<i32>} : memref<1x3x2x128xf32, #tpu.memory_space<vmem>>, vector<1x1x2x128xf32>,
    return
  }
  func.func @transform_0(%arg0: i32, %arg1: i32) -> (i32, i32, i32, i32) {
    %c0_i32 = arith.constant 0 : i32
    %c0_i32_0 = arith.constant 0 : i32
    %c0_i32_1 = arith.constant 0 : i32
    return %arg0, %c0_i32, %arg1, %c0_i32_0 : i32, i32, i32, i32
  }
  func.func @transform_1(%arg0: i32, %arg1: i32) -> (i32, i32, i32, i32) {
    %c0_i32 = arith.constant 0 : i32
    %c0_i32_0 = arith.constant 0 : i32
    %c0_i32_1 = arith.constant 0 : i32
    return %arg0, %c0_i32, %arg1, %c0_i32_0 : i32, i32, i32, i32
  }
  func.func @transform_2(%arg0: i32, %arg1: i32) -> (i32, i32, i32, i32) {
    %c0_i32 = arith.constant 0 : i32
    %c0_i32_0 = arith.constant 0 : i32
    %c0_i32_1 = arith.constant 0 : i32
    return %arg0, %c0_i32, %arg1, %c0_i32_0 : i32, i32, i32, i32
  }
}

</mosaic_0001>

<llo_original>
// kernel: tpu_custom_call.1
$region0: #{tpu_custom_call.1}
  #allocation0 [shape = 'u32[]', space=smem, size = 0x4, offset = 0x4, fixed_abs, tag = 'smem constant byte address 0x4 - core index']
  #allocation1 [shape = 'u32[144,128]{1,0:T(1,128)}', space=vmem, size = 0x12000, scoped, tag = 'internal scratch']
  %s0 = inlined_call_operand.hbm [shape: f32[2,3,2,128], index: 0, kind: input, shape index: {}]
  %s1 = inlined_call_operand.hbm [shape: f32[2,3,2,128], index: 1, kind: input, shape index: {}]
  %s2 = inlined_call_operand.hbm [shape: f32[2,3,2,128], index: 2, kind: output, shape index: {}]
  %s3 = sld [smem:[#allocation0]]
  $region49: #{tpu_custom_call.1} parent=0
    _
  %s5 = ssub.s32 1, %s3
  %s6 = scalar_select 0, %s5, %s3
  $region1: #{tpu_custom_call.1} parent=0
    #allocation2 [shape = 'u8[6144]{0}', space=vmem, size = 0x1800, scoped, tag = 'input window, operand 0']
    #allocation3 [shape = 's32[2]{0}', space=sflag, size = 0x8, scoped, tag = 'scoped memory for tpu_custom_call.1']
    #allocation4 [shape = 's32[2]{0}', space=sflag, size = 0x8, scoped, tag = 'scoped memory for tpu_custom_call.1']
    #allocation5 [shape = 'u8[6144]{0}', space=vmem, size = 0x1800, scoped, tag = 'input window, operand 1']
    #allocation6 [shape = 's32[2]{0}', space=sflag, size = 0x8, scoped, tag = 'scoped memory for tpu_custom_call.1']
    #allocation7 [shape = 'u8[6144]{0}', space=vmem, size = 0x1800, scoped, tag = 'output window, operand 0']
    %7 = vsyncpa [#allocation3], 0
    %s8 = scalar_lea.sflag [#allocation3], 1
    %9 = vsyncpa %s8, 0
    %10 = vsyncpa [#allocation6], 0
    %s11 = scalar_lea.sflag [#allocation6], 1
    %12 = vsyncpa %s11, 0
    %13 = vsyncpa [#allocation4], 0
    %s14 = scalar_lea.sflag [#allocation4], 1
    %15 = vsyncpa %s14, 0
    loop: start=0, step=1, limit=4
    $region2: #{tpu_custom_call.1} parent=1 // loop_pre_header
      _
    $region3: #{tpu_custom_call.1} parent=1 // loop_header
      %s17 = sphi 0, %s21
      %p18 = scmp.ge.s32.totalorder %s17, 4
      %s24 = sphi 0, %s36
      %s25 = sphi 0, %s32
      %s26 = sphi 0, %s24
      %s27 = sphi 0, %s25
      %s28 = sphi 0, %s26
      %s29 = sphi 0, %s27
      %s41 = sphi 0, %s43
      %s44 = sphi 0, %s41
      %s45 = sphi 0, %s44
      %s61 = sphi 0, %s45
      %s69 = sphi 0, %s71
      %s72 = sphi 0, %s69
      %s73 = sphi 0, %s72
      %s89 = sphi 0, %s73
      %s97 = sphi 0, %s99
      %s100 = sphi 0, %s97
      %s101 = sphi 0, %s100
      %s117 = sphi 0, %s101
    $region4: #{tpu_custom_call.1} parent=1 // loop_header_branch
      %20 = sbr.rel (%p18) target = $region8
    $region5: #{tpu_custom_call.1} parent=1 // loop_body
      %s22 = ssub.s32 %s17, 1
      %s23 = ssub.s32 %s17, 2
      %s30 = sadd.s32 1, %s25
      %p31 = scmp.ge.s32.totalorder %s30, 1
      %s32 = scalar_select %p31, 0, %s30
      %s33 = sadd.s32 1, %s24
      %s34 = scalar_select %p31, %s33, %s24
      %p35 = scmp.ge.s32.totalorder %s34, 2
      %s36 = scalar_select %p35, 0, %s34
      %s37 = ssub.s32 %s24, %s36
      %s38 = ssub.s32 %s25, %s32
      %s39 = sor.u32 %s37, %s38
      %p40 = scmp.eq.s32.totalorder %s39, 0
      %s42 = sadd.s32 %s41, 1
      %s43 = scalar_select %p40, %s41, %s42
      %p46 = pneg %p40
      %p47 = scmp.eq.s32.totalorder %s17, 1
      %p48 = por %p46, %p47
      %p49 = scmp.ne.s32.totalorder %s41, %s44
      %p50 = scmp.eq.s32.totalorder %s17, 0
      %p51 = por %p49, %p50
      %p52 = scmp.ne.s32.totalorder %s41, %s44
      %p53 = scmp.eq.s32.totalorder %s22, 1
      %p54 = por %p52, %p53
      %p55 = scmp.ne.s32.totalorder %s44, %s45
      %p56 = scmp.eq.s32.totalorder %s22, 0
      %p57 = por %p55, %p56
      %p58 = scmp.ne.s32.totalorder %s44, %s45
      %p59 = scmp.eq.s32.totalorder %s23, 1
      %p60 = por %p58, %p59
      %p62 = scmp.ne.s32.totalorder %s45, %s61
      %p63 = scmp.eq.s32.totalorder %s23, 0
      %p64 = por %p62, %p63
      %s65 = ssub.s32 %s24, %s36
      %s66 = ssub.s32 %s25, %s32
      %s67 = sor.u32 %s65, %s66
      %p68 = scmp.eq.s32.totalorder %s67, 0
      %s70 = sadd.s32 %s69, 1
      %s71 = scalar_select %p68, %s69, %s70
      %p74 = pneg %p68
      %p75 = scmp.eq.s32.totalorder %s17, 1
      %p76 = por %p74, %p75
      %p77 = scmp.ne.s32.totalorder %s69, %s72
      %p78 = scmp.eq.s32.totalorder %s17, 0
      %p79 = por %p77, %p78
      %p80 = scmp.ne.s32.totalorder %s69, %s72
      %p81 = scmp.eq.s32.totalorder %s22, 1
      %p82 = por %p80, %p81
      %p83 = scmp.ne.s32.totalorder %s72, %s73
      %p84 = scmp.eq.s32.totalorder %s22, 0
      %p85 = por %p83, %p84
      %p86 = scmp.ne.s32.totalorder %s72, %s73
      %p87 = scmp.eq.s32.totalorder %s23, 1
      %p88 = por %p86, %p87
      %p90 = scmp.ne.s32.totalorder %s73, %s89
      %p91 = scmp.eq.s32.totalorder %s23, 0
      %p92 = por %p90, %p91
      %s93 = ssub.s32 %s24, %s36
      %s94 = ssub.s32 %s25, %s32
      %s95 = sor.u32 %s93, %s94
      %p96 = scmp.eq.s32.totalorder %s95, 0
      %s98 = sadd.s32 %s97, 1
      %s99 = scalar_select %p96, %s97, %s98
      %p102 = pneg %p96
      %p103 = scmp.eq.s32.totalorder %s17, 1
      %p104 = por %p102, %p103
      %p105 = scmp.ne.s32.totalorder %s97, %s100
      %p106 = scmp.eq.s32.totalorder %s17, 0
      %p107 = por %p105, %p106
      %p108 = scmp.ne.s32.totalorder %s97, %s100
      %p109 = scmp.eq.s32.totalorder %s22, 1
      %p110 = por %p108, %p109
      %p111 = scmp.ne.s32.totalorder %s100, %s101
      %p112 = scmp.eq.s32.totalorder %s22, 0
      %p113 = por %p111, %p112
      %p114 = scmp.ne.s32.totalorder %s100, %s101
      %p115 = scmp.eq.s32.totalorder %s23, 1
      %p116 = por %p114, %p115
      %p118 = scmp.ne.s32.totalorder %s101, %s117
      %p119 = scmp.eq.s32.totalorder %s23, 0
      %p120 = por %p118, %p119
      %p121 = scmp.le.s32.totalorder 1, %s17
      %p122 = scmp.lt.s32.totalorder %s17, 3
      %p123 = pnand %p121, %p122
      %p124 = pneg %p123
      // Predicated region
      $region9: #{tpu_custom_call.1} parent=5 // pred_check
        _
      $region10: #{tpu_custom_call.1} parent=5 // pred_check_branch
        %126 = sbr.rel (%p123) target = $region12
      $region11: #{tpu_custom_call.1} parent=5 // pred_region
        %s127 = ssub.s32 %s17, 1
      $region12: #{tpu_custom_call.1} parent=5 // pred_fallthru
        _
      %p128 = scmp.lt.s32.totalorder %s17, 2
      // Predicated region
      $region13: #{tpu_custom_call.1} parent=5 // pred_check
        %p129 = pneg %p128
      $region14: #{tpu_custom_call.1} parent=5 // pred_check_branch
        %131 = sbr.rel (%p129) target = $region16
      $region15: #{tpu_custom_call.1} parent=5 // pred_region
        // Predicated region
        $region17: #{tpu_custom_call.1} parent=15 // pred_check
          %p132 = pneg %p51
        $region18: #{tpu_custom_call.1} parent=15 // pred_check_branch
          %134 = sbr.rel (%p132) target = $region20
        $region19: #{tpu_custom_call.1} parent=15 // pred_region
          %s135 = sand.u32 %s41, 1
          %s136 = scalar_lea.sflag [#allocation3], %s135
          %s137 = sand.u32 %s41, 1
          %s138 = smul.addr %s137, 6
          %s139 = scalar_lea.vmem [#allocation2], %s138
          %s141 = ssub.s32 96, 96
          %142 = vsyncadd %s136, %s141
          %s143 = smul.addr %s24, 3
          %s144 = sadd.s32 %s25, %s143
          %s145 = smul.addr %s144, 32
          %s146 = scalar_lea.hbm %s0, %s145
          %s147 = sshll.u32 %s139, 4
          %s148 = int_to_ptr.vmem [resolvable:$true] %s147
          %153 = dma.hbm_to_vmem [thread:$0]  %s146, 96, %s148, %s136, 32, 32, 2
        $region20: #{tpu_custom_call.1} parent=15 // pred_fallthru
          _
        // Predicated region
        $region21: #{tpu_custom_call.1} parent=15 // pred_check
          %p154 = pneg %p79
        $region22: #{tpu_custom_call.1} parent=15 // pred_check_branch
          %156 = sbr.rel (%p154) target = $region24
        $region23: #{tpu_custom_call.1} parent=15 // pred_region
          %s157 = sand.u32 %s69, 1
          %s158 = scalar_lea.sflag [#allocation6], %s157
          %s159 = sand.u32 %s69, 1
          %s160 = smul.addr %s159, 6
          %s161 = scalar_lea.vmem [#allocation5], %s160
          %s163 = ssub.s32 96, 96
          %164 = vsyncadd %s158, %s163
          %s165 = smul.addr %s24, 3
          %s166 = sadd.s32 %s25, %s165
          %s167 = smul.addr %s166, 32
          %s168 = scalar_lea.hbm %s1, %s167
          %s169 = sshll.u32 %s161, 4
          %s170 = int_to_ptr.vmem [resolvable:$true] %s169
          %175 = dma.hbm_to_vmem [thread:$0]  %s168, 96, %s170, %s158, 32, 32, 2
        $region24: #{tpu_custom_call.1} parent=15 // pred_fallthru
          _
      $region16: #{tpu_custom_call.1} parent=5 // pred_fallthru
        _
      %p176 = scmp.le.s32.totalorder 1, %s17
      %p177 = scmp.lt.s32.totalorder %s17, 3
      %p178 = pnand %p176, %p177
      %p179 = pneg %p178
      // Predicated region
      $region25: #{tpu_custom_call.1} parent=5 // pred_check
        _
      $region26: #{tpu_custom_call.1} parent=5 // pred_check_branch
        %181 = sbr.rel (%p178) target = $region28
      $region27: #{tpu_custom_call.1} parent=5 // pred_region
        %s182 = ssub.s32 %s17, 1
        %s183 = sand.u32 %s44, 1
        %s184 = scalar_lea.sflag [#allocation3], %s183
        %s185 = sand.u32 %s44, 1
        %s186 = smul.addr %s185, 6
        %s187 = scalar_lea.vmem [#allocation2], %s186
        // Predicated region
        $region29: #{tpu_custom_call.1} parent=27 // pred_check
          %p188 = pneg %p57
        $region30: #{tpu_custom_call.1} parent=27 // pred_check_branch
          %190 = sbr.rel (%p188) target = $region32
        $region31: #{tpu_custom_call.1} parent=27 // pred_region
          %191 = dma.done %s184, 96
        $region32: #{tpu_custom_call.1} parent=27 // pred_fallthru
          _
        %s192 = sand.u32 %s72, 1
        %s193 = scalar_lea.sflag [#allocation6], %s192
        %s194 = sand.u32 %s72, 1
        %s195 = smul.addr %s194, 6
        %s196 = scalar_lea.vmem [#allocation5], %s195
        // Predicated region
        $region33: #{tpu_custom_call.1} parent=27 // pred_check
          %p197 = pneg %p85
        $region34: #{tpu_custom_call.1} parent=27 // pred_check_branch
          %199 = sbr.rel (%p197) target = $region36
        $region35: #{tpu_custom_call.1} parent=27 // pred_region
          %200 = dma.done %s193, 96
        $region36: #{tpu_custom_call.1} parent=27 // pred_fallthru
          _
        %s201 = sand.u32 %s44, 1
        %s202 = scalar_lea.sflag [#allocation3], %s201
        %s203 = sand.u32 %s44, 1
        %s204 = smul.addr %s203, 6
        %s205 = scalar_lea.vmem [#allocation2], %s204
        %p206 = pneg %p57
        %p207 = pneg %p54
        %s208 = sand.u32 %s72, 1
        %s209 = scalar_lea.sflag [#allocation6], %s208
        %s210 = sand.u32 %s72, 1
        %s211 = smul.addr %s210, 6
        %s212 = scalar_lea.vmem [#allocation5], %s211
        %p213 = pneg %p85
        %p214 = pneg %p82
        %p215 = pneg %p113
        %p216 = pneg %p110
        %s217 = sand.u32 %s100, 1
        %s218 = scalar_lea.sflag [#allocation4], %s217
        %s219 = sand.u32 %s100, 1
        %s220 = smul.addr %s219, 6
        %s221 = scalar_lea.vmem [#allocation7], %s220
        %v222 = vld [vmem:[%s187] sm:$0x3]
        %v223 = vld [vmem:[%s187 + $0x2] sm:$0x3]
        %v224 = vld [vmem:[%s187 + $0x4] sm:$0x3]
        %v225 = vld [vmem:[%s196] sm:$0x3]
        %v226 = vld [vmem:[%s196 + $0x2] sm:$0x3]
        %v227 = vld [vmem:[%s196 + $0x4] sm:$0x3]
        %v228 = vmul.f32 %v225, 0.0
        %v229 = vadd.f32 %v228, %v226
        %v230 = vmul.f32 %v227, 0.0
        %v231 = vadd.f32 %v229, %v230
        %v232 = vmax.f32 %v231, 0.0
        %v233 = vmul.f32 %v232, 0.5
        %v234 = vadd.f32 %v222, %v233
        %235 = vst [vmem:[%s221] sm:$0x3] %v234
        %v236 = vadd.f32 %v223, %v233
        %s237 = scalar_lea.vmem %s221, 2 [#allocation7]
        %238 = vst [vmem:[%s237] sm:$0x3] %v236
        %v239 = vadd.f32 %v224, %v233
        %s240 = scalar_lea.vmem %s221, 4 [#allocation7]
        %241 = vst [vmem:[%s240] sm:$0x3] %v239
        %s242 = sand.u32 %s100, 1
        %s243 = scalar_lea.sflag [#allocation4], %s242
        %s244 = sand.u32 %s100, 1
        %s245 = smul.addr %s244, 6
        %s246 = scalar_lea.vmem [#allocation7], %s245
        // Predicated region
        $region37: #{tpu_custom_call.1} parent=27 // pred_check
          %p247 = pneg %p110
        $region38: #{tpu_custom_call.1} parent=27 // pred_check_branch
          %249 = sbr.rel (%p247) target = $region40
        $region39: #{tpu_custom_call.1} parent=27 // pred_region
          %s251 = ssub.s32 96, 96
          %252 = vsyncadd %s243, %s251
          %s253 = smul.addr %s26, 3
          %s254 = sadd.s32 %s27, %s253
          %s255 = smul.addr %s254, 32
          %s256 = scalar_lea.hbm %s2, %s255
          %s257 = sshll.u32 %s246, 4
          %s258 = int_to_ptr.vmem [resolvable:$true] %s257
          %263 = dma.vmem_to_hbm [thread:$0]  %s258, 96, %s256, %s243, 32, 32, 2
        $region40: #{tpu_custom_call.1} parent=27 // pred_fallthru
          _
      $region28: #{tpu_custom_call.1} parent=5 // pred_fallthru
        _
      %p264 = scmp.le.s32.totalorder 2, %s17
      // Predicated region
      $region41: #{tpu_custom_call.1} parent=5 // pred_check
        %p265 = pneg %p264
      $region42: #{tpu_custom_call.1} parent=5 // pred_check_branch
        %267 = sbr.rel (%p265) target = $region44
      $region43: #{tpu_custom_call.1} parent=5 // pred_region
        %s268 = ssub.s32 %s17, 2
        // Predicated region
        $region45: #{tpu_custom_call.1} parent=43 // pred_check
          %p269 = pneg %p116
        $region46: #{tpu_custom_call.1} parent=43 // pred_check_branch
          %271 = sbr.rel (%p269) target = $region48
        $region47: #{tpu_custom_call.1} parent=43 // pred_region
          %s272 = sand.u32 %s101, 1
          %s273 = scalar_lea.sflag [#allocation4], %s272
          %s274 = sand.u32 %s101, 1
          %s275 = smul.addr %s274, 6
          %s276 = scalar_lea.vmem [#allocation7], %s275
          %277 = dma.done %s273, 96
        $region48: #{tpu_custom_call.1} parent=43 // pred_fallthru
          _
      $region44: #{tpu_custom_call.1} parent=5 // pred_fallthru
        _
    $region6: #{tpu_custom_call.1} parent=1 // loop_footer
      %s21 = sadd.s32 1, %s17
    $region7: #{tpu_custom_call.1} parent=1 // loop_footer_branch
      %16 = sbr.rel target = $region3
    $region8: #{tpu_custom_call.1} parent=1 // loop_exit
      _
    %278 = vsyncpa [#allocation3], 1
    %s279 = scalar_lea.sflag [#allocation3], 1
    %280 = vsyncpa %s279, 1
    %281 = vsyncpa [#allocation6], 1
    %s282 = scalar_lea.sflag [#allocation6], 1
    %283 = vsyncpa %s282, 1
    %284 = vsyncpa [#allocation4], 1
    %s285 = scalar_lea.sflag [#allocation4], 1
    %286 = vsyncpa %s285, 1

</llo_original>
